<compile_context>
chip_gen: v6e
topology: v6e:2x2x1
jax: 0.10.0
libtpu: 0.0.40
codegen_flags: <defaults>
</compile_context>

<pallas_src>
import jax
import jax.numpy as jnp
from jax.experimental import pallas as pl
from jax.experimental.pallas import tpu as pltpu


def _round_up(x, m):
    return (x + m - 1) // m * m


def _cdiv(a, b):
    return (a + b - 1) // b


def _vmem_capacity_bytes():
    """Per-core VMEM capacity; conservative (v7x, 64 MiB) fallback."""
    try:
        return int(pltpu.get_tpu_info().vmem_capacity_bytes)
    except Exception:
        return 64 * 1024 * 1024


def _decoder_kernel(x_ref, w1_ref, b1_ref, w2_ref, b2_ref, o_ref):
    # First linear (MXU, f32 accumulation) + bias + ReLU (VPU, f32).
    h = jnp.dot(x_ref[...], w1_ref[...], preferred_element_type=jnp.float32)
    h = jnp.maximum(h + b1_ref[...], 0.0)          # b1 is [1, hidden] -> broadcasts over batch

    # Second linear.  Cast h to the MXU operand dtype (no-op for f32 weights).
    logits = jnp.dot(h.astype(w2_ref.dtype), w2_ref[...],
                     preferred_element_type=jnp.float32)
    logits = logits + b2_ref[...]                  # b2 is [1, out_p]

    # Sigmoid = 1 / (1 + exp(-z)): exp and vrcp both map to the EUP slot and
    # co-issue with the VALU adds above.  approx=True avoids the Newton
    # refinement VALU ops (|rel err| well below bf16 precision).
    e = jnp.exp(-logits)
    o_ref[...] = pl.reciprocal(1.0 + e, approx=True).astype(o_ref.dtype)


def prepare_decoder_params(w1, b1, w2, b2, *, mxu_dtype=None):
    """One-time weight preparation (call at init; results are jit constants).

    w1: [latent, hidden]  (transposed from PyTorch's [hidden, latent])
    b1: [hidden]
    w2: [hidden, output]
    b2: [output]
    mxu_dtype: None (f32 matmuls) or jnp.bfloat16 (v6e/v7x MXU fast path).
    Only the output feature dim is padded (to a multiple of 128) for lane-dense
    stores; biases stay f32 for an exact epilogue on all generations.
    """
    latent, hidden = w1.shape
    out_dim = w2.shape[1]
    out_p = _round_up(out_dim, 128)
    io_dtype = jnp.float32 if mxu_dtype is None else mxu_dtype

    w1p = w1.astype(io_dtype)                                          # [latent, hidden]
    b1p = b1.astype(jnp.float32).reshape(1, hidden)                    # [1, hidden]
    w2p = jnp.pad(w2.astype(io_dtype), ((0, 0), (0, out_p - out_dim)))  # [hidden, out_p]
    b2p = jnp.pad(b2.astype(jnp.float32), (0, out_p - out_dim)).reshape(1, out_p)
    return (w1p, b1p, w2p, b2p, out_dim)


def decoder_forward(x, params, *, block_batch=2048, out_dtype=None):
    """Fused MLP decoder forward.  x: [B, latent] -> [B, output]."""
    w1p, b1p, w2p, b2p, out_dim = params
    B, latent = x.shape
    hidden = w1p.shape[1]
    out_p = w2p.shape[1]
    io_dtype = w1p.dtype
    io_itemsize = jnp.dtype(io_dtype).itemsize
    out_dtype = x.dtype if out_dtype is None else out_dtype
    out_itemsize = jnp.dtype(out_dtype).itemsize

    # ---- Generation-aware batch-tile sizing.
    # Resident blocks (constant index_map) still get the default 2-deep buffer
    # allocation, so count them twice.
    sublane = 16 if io_itemsize == 2 else 8
    resident_bytes = 2 * (io_itemsize * (latent * hidden + hidden * out_p)
                          + 4 * (hidden + out_p))
    row_bytes = (2 * io_itemsize * latent        # double-buffered x tile
                 + 2 * out_itemsize * out_p      # double-buffered out tile
                 + 4 * hidden + 4 * out_p)       # live h + logits (f32)
    vmem_cap = _vmem_capacity_bytes()
    budget = int(0.7 * vmem_cap)                 # leave headroom for compiler scratch
    max_tb = max(sublane, ((budget - resident_bytes) // row_bytes) // sublane * sublane)
    TB = min(block_batch, _round_up(B, sublane), max_tb)

    # Megacore guard (v7x): if everything fits in one tile but the batch is big
    # enough, split into >=2 tiles so ("parallel",) feeds both TensorCores.
    if B >= 2 * sublane and _cdiv(B, TB) < 2:
        TB = _round_up(_cdiv(B, 2), sublane)

    B_pad = _cdiv(B, TB) * TB
    grid = (B_pad // TB,)

    # Explicit scoped-VMEM limit: actual working set + headroom, capped per chip.
    working_set = resident_bytes + TB * row_bytes
    vmem_limit = int(min(0.9 * vmem_cap, working_set + (32 << 20)))
    vmem_limit = max(vmem_limit, 16 << 20)

    # ---- Single fused pass over x: cast (no-op for f32) + batch pad.
    xp = x.astype(io_dtype)
    if B_pad != B:
        xp = jnp.pad(xp, ((0, B_pad - B), (0, 0)))

    tiled = lambda i: (i, 0)      # x / out: new batch tile each grid step
    resident = lambda i: (0, 0)   # weights / biases: same block -> stay in VMEM

    cost = pl.CostEstimate(
        flops=2 * B_pad * (latent * hidden + hidden * out_p),
        transcendentals=B_pad * out_p,
        bytes_accessed=(B_pad * latent * io_itemsize
                        + io_itemsize * (latent * hidden + hidden * out_p)
                        + 4 * (hidden + out_p)
                        + B_pad * out_p * out_itemsize),
    )

    out_padded = pl.pallas_call(
        _decoder_kernel,
        out_shape=jax.ShapeDtypeStruct((B_pad, out_p), out_dtype),
        grid=grid,
        in_specs=[
            pl.BlockSpec((TB, latent), tiled),        # latent = full array dim (no pad)
            pl.BlockSpec((latent, hidden), resident),  # full-dim block
            pl.BlockSpec((1, hidden), resident),
            pl.BlockSpec((hidden, out_p), resident),   # lane-dense output columns
            pl.BlockSpec((1, out_p), resident),
        ],
        out_specs=pl.BlockSpec((TB, out_p), tiled),
        compiler_params=pltpu.CompilerParams(
            dimension_semantics=("parallel",),         # shard batch tiles across TCs (v7x)
            vmem_limit_bytes=vmem_limit,
        ),
        cost_estimate=cost,
    )(xp, w1p, b1p, w2p, b2p)

    # Skip the post-call slice entirely when no padding was introduced.
    if B_pad == B and out_p == out_dim:
        return out_padded
    return out_padded[:B, :out_dim]


def decoder_ref(x, w1, b1, w2, b2):
    h = jnp.maximum(x @ w1 + b1, 0.0)
    return jax.nn.sigmoid(h @ w2 + b2)


if __name__ == "__main__":
    # Small shapes consistent with the module's forward pass.
    batch, latent_dim, hidden_dim, output_dim = 8, 16, 32, 64

    key = jax.random.PRNGKey(0)
    kx, kw1, kb1, kw2, kb2 = jax.random.split(key, 5)

    x = jax.random.normal(kx, (batch, latent_dim), dtype=jnp.float32)
    # PyTorch nn.Linear stores weight as [out, in]; we keep the math identical
    # (y = x @ W^T + b) by materializing the transposed [in, out] matrices here.
    w1 = jax.random.normal(kw1, (latent_dim, hidden_dim), dtype=jnp.float32) * 0.1
    b1 = jax.random.normal(kb1, (hidden_dim,), dtype=jnp.float32) * 0.1
    w2 = jax.random.normal(kw2, (hidden_dim, output_dim), dtype=jnp.float32) * 0.1
    b2 = jax.random.normal(kb2, (output_dim,), dtype=jnp.float32) * 0.1

    ref = decoder_ref(x, w1, b1, w2, b2)

    # f32 MXU operands (approx-reciprocal sigmoid -> loose-ish tolerance).
    params_f32 = prepare_decoder_params(w1, b1, w2, b2)
    out = jax.block_until_ready(decoder_forward(x, params_f32))
    assert out.shape == (batch, output_dim)
    assert out.dtype == x.dtype
    assert jnp.allclose(out, ref, atol=1e-2, rtol=1e-2), "f32 path mismatch vs reference"

    # bf16 MXU operands (v6e/v7x fast path): looser tolerance; output stays f32.
    params_bf16 = prepare_decoder_params(w1, b1, w2, b2, mxu_dtype=jnp.bfloat16)
    out_bf16 = jax.block_until_ready(decoder_forward(x, params_bf16))
    assert out_bf16.shape == (batch, output_dim)
    assert jnp.allclose(out_bf16, ref, atol=3e-2, rtol=3e-2), "bf16 path mismatch vs reference"

    print("KERNEL_OK")
</pallas_src>

<mosaic_0001>
module attributes {stable_mosaic.version = 11 : i64} {
  func.func @_decoder_kernel(%arg0: i32, %arg1: memref<8x16xf32, #tpu.memory_space<vmem>>, %arg2: memref<16x32xf32, #tpu.memory_space<vmem>>, %arg3: memref<1x32xf32, #tpu.memory_space<vmem>>, %arg4: memref<32x128xf32, #tpu.memory_space<vmem>>, %arg5: memref<1x128xf32, #tpu.memory_space<vmem>>, %arg6: memref<8x128xf32, #tpu.memory_space<vmem>>) attributes {dimension_semantics = [#tpu.dimension_semantics<parallel>], iteration_bounds = array<i64: 1>, scalar_prefetch = 0 : i64, scratch_operands = 0 : i64, tpu.core_type = #tpu.core_type<tc>, window_params = [{transform_indices = @transform_0, window_bounds = array<i64: 8, 16>}, {pipeline_mode = #tpu.pipeline_mode<synchronous>, transform_indices = @transform_1, window_bounds = array<i64: 16, 32>}, {pipeline_mode = #tpu.pipeline_mode<synchronous>, transform_indices = @transform_2, window_bounds = array<i64: 1, 32>}, {pipeline_mode = #tpu.pipeline_mode<synchronous>, transform_indices = @transform_3, window_bounds = array<i64: 32, 128>}, {pipeline_mode = #tpu.pipeline_mode<synchronous>, transform_indices = @transform_4, window_bounds = array<i64: 1, 128>}, {transform_indices = @transform_5, window_bounds = array<i64: 8, 128>}]} {
    %c0 = arith.constant 0 : index
    %c0_0 = arith.constant 0 : index
    %0 = vector.load %arg1[%c0, %c0_0] : memref<8x16xf32, #tpu.memory_space<vmem>>, vector<8x16xf32>
    %c0_1 = arith.constant 0 : index
    %c0_2 = arith.constant 0 : index
    %1 = vector.load %arg2[%c0_1, %c0_2] : memref<16x32xf32, #tpu.memory_space<vmem>>, vector<16x32xf32>
    %cst = arith.constant dense<0.000000e+00> : vector<8x32xf32>
    %2 = tpu.matmul %0, %1, %cst {dimension_numbers = #tpu.dot_dimension_numbers<[1], [0], [0], [1], [0, 0, 1, 1], [], []>} : vector<8x16xf32>, vector<16x32xf32>, vector<8x32xf32> -> vector<8x32xf32>
    %c0_3 = arith.constant 0 : index
    %c0_4 = arith.constant 0 : index
    %3 = vector.load %arg3[%c0_3, %c0_4] : memref<1x32xf32, #tpu.memory_space<vmem>>, vector<1x32xf32>
    %4 = vector.broadcast %3 : vector<1x32xf32> to vector<8x32xf32>
    %5 = arith.addf %2, %4 : vector<8x32xf32>
    %cst_5 = arith.constant 0.000000e+00 : f32
    %6 = vector.broadcast %cst_5 : f32 to vector<8x32xf32>
    %7 = arith.maximumf %5, %6 : vector<8x32xf32>
    %c0_6 = arith.constant 0 : index
    %c0_7 = arith.constant 0 : index
    %8 = vector.load %arg4[%c0_6, %c0_7] : memref<32x128xf32, #tpu.memory_space<vmem>>, vector<32x128xf32>
    %cst_8 = arith.constant dense<0.000000e+00> : vector<8x128xf32>
    %9 = tpu.matmul %7, %8, %cst_8 {dimension_numbers = #tpu.dot_dimension_numbers<[1], [0], [0], [1], [0, 0, 1, 1], [], []>} : vector<8x32xf32>, vector<32x128xf32>, vector<8x128xf32> -> vector<8x128xf32>
    %c0_9 = arith.constant 0 : index
    %c0_10 = arith.constant 0 : index
    %10 = vector.load %arg5[%c0_9, %c0_10] : memref<1x128xf32, #tpu.memory_space<vmem>>, vector<1x128xf32>
    %11 = vector.broadcast %10 : vector<1x128xf32> to vector<8x128xf32>
    %12 = arith.addf %9, %11 : vector<8x128xf32>
    %cst_11 = arith.constant 0.000000e+00 : f32
    %13 = vector.broadcast %cst_11 : f32 to vector<8x128xf32>
    %14 = arith.subf %13, %12 : vector<8x128xf32>
    %15 = math.exp %14 : vector<8x128xf32>
    %cst_12 = arith.constant 1.000000e+00 : f32
    %16 = vector.broadcast %cst_12 : f32 to vector<8x128xf32>
    %17 = arith.addf %16, %15 : vector<8x128xf32>
    %18 = tpu.reciprocal %17 {approx = true} : vector<8x128xf32> -> vector<8x128xf32>
    %c0_13 = arith.constant 0 : index
    %c0_14 = arith.constant 0 : index
    %19 = vector.load %arg6[%c0_13, %c0_14] : memref<8x128xf32, #tpu.memory_space<vmem>>, vector<8x128xf32>
    tpu.vector_store %arg6[%c0_13, %c0_14], %18 {strides = array<i32>} : memref<8x128xf32, #tpu.memory_space<vmem>>, vector<8x128xf32>,
    return
  }
  func.func @transform_0(%arg0: i32) -> (i32, i32) {
    %c0_i32 = arith.constant 0 : i32
    %c0_i32_0 = arith.constant 0 : i32
    return %arg0, %c0_i32 : i32, i32
  }
  func.func @transform_1(%arg0: i32) -> (i32, i32) {
    %c0_i32 = arith.constant 0 : i32
    %c0_i32_0 = arith.constant 0 : i32
    %c0_i32_1 = arith.constant 0 : i32
    return %c0_i32, %c0_i32_0 : i32, i32
  }
  func.func @transform_2(%arg0: i32) -> (i32, i32) {
    %c0_i32 = arith.constant 0 : i32
    %c0_i32_0 = arith.constant 0 : i32
    %c0_i32_1 = arith.constant 0 : i32
    return %c0_i32, %c0_i32_0 : i32, i32
  }
  func.func @transform_3(%arg0: i32) -> (i32, i32) {
    %c0_i32 = arith.constant 0 : i32
    %c0_i32_0 = arith.constant 0 : i32
    %c0_i32_1 = arith.constant 0 : i32
    return %c0_i32, %c0_i32_0 : i32, i32
  }
  func.func @transform_4(%arg0: i32) -> (i32, i32) {
    %c0_i32 = arith.constant 0 : i32
    %c0_i32_0 = arith.constant 0 : i32
    %c0_i32_1 = arith.constant 0 : i32
    return %c0_i32, %c0_i32_0 : i32, i32
  }
  func.func @transform_5(%arg0: i32) -> (i32, i32) {
    %c0_i32 = arith.constant 0 : i32
    %c0_i32_0 = arith.constant 0 : i32
    return %arg0, %c0_i32 : i32, i32
  }
}

</mosaic_0001>

<llo_original>
// kernel: tpu_custom_call.1
$region0: #{tpu_custom_call.1}
  #allocation0 [shape = 'u32[]', space=smem, size = 0x4, offset = 0x4, fixed_abs, tag = 'smem constant byte address 0x4 - core index']
  #allocation1 [shape = 'u32[144,128]{1,0:T(1,128)}', space=vmem, size = 0x12000, scoped, tag = 'internal scratch']
  %s0 = inlined_call_operand.hbm [shape: f32[8,16], index: 0, kind: input, shape index: {}]
  %s1 = inlined_call_operand.hbm [shape: f32[16,32], index: 1, kind: input, shape index: {}]
  %s2 = inlined_call_operand.vmem [shape: f32[1,32], index: 2, kind: input, shape index: {}]
  %s3 = inlined_call_operand.hbm [shape: f32[32,128], index: 3, kind: input, shape index: {}]
  %s4 = inlined_call_operand.vmem [shape: f32[1,128], index: 4, kind: input, shape index: {}]
  %s5 = inlined_call_operand.hbm [shape: f32[8,128], index: 5, kind: output, shape index: {}]
  %s6 = sld [smem:[#allocation0]]
  $region42: #{tpu_custom_call.1} parent=0
    _
  %s8 = ssub.s32 1, %s6
  %s9 = scalar_select 0, %s8, %s6
  $region1: #{tpu_custom_call.1} parent=0
    #allocation2 [shape = 'u8[4096]{0}', space=vmem, size = 0x1000, scoped, tag = 'input window, operand 0, single buffered']
    #allocation3 [shape = 's32[1]{0}', space=sflag, size = 0x4, scoped, tag = 'scoped memory for tpu_custom_call.1']
    #allocation4 [shape = 's32[1]{0}', space=sflag, size = 0x4, scoped, tag = 'scoped memory for tpu_custom_call.1']
    #allocation5 [shape = 'u8[8192]{0}', space=vmem, size = 0x2000, scoped, tag = 'input window, operand 1, single buffered']
    #allocation6 [shape = 's32[1]{0}', space=sflag, size = 0x4, scoped, tag = 'scoped memory for tpu_custom_call.1']
    #allocation7 [shape = 'u8[16384]{0}', space=vmem, size = 0x4000, scoped, tag = 'input window, operand 3, single buffered']
    #allocation8 [shape = 'u8[4096]{0}', space=vmem, size = 0x1000, scoped, tag = 'output window, operand 0, single buffered']
    %10 = vsyncpa [#allocation3], 0
    %11 = vsyncpa [#allocation6], 0
    %12 = vsyncpa [#allocation4], 0
    // Predicated region
    $region2: #{tpu_custom_call.1} parent=1 // pred_check
      _
    $region3: #{tpu_custom_call.1} parent=1 // pred_check_branch
      %14 = sbr.rel (0) target = $region5
    $region4: #{tpu_custom_call.1} parent=1 // pred_region
      %s16 = ssub.s32 128, 128
      %17 = vsyncadd [#allocation3], %s16
      %s19 = sshll.u32 [#allocation2], 4
      %s20 = int_to_ptr.vmem [resolvable:$true] %s19
      %22 = dma.hbm_to_vmem [thread:$0]  %s0, 128, %s20, [#allocation3]
    $region5: #{tpu_custom_call.1} parent=1 // pred_fallthru
      _
    // Predicated region
    $region6: #{tpu_custom_call.1} parent=1 // pred_check
      _
    $region7: #{tpu_custom_call.1} parent=1 // pred_check_branch
      %24 = sbr.rel (0) target = $region9
    $region8: #{tpu_custom_call.1} parent=1 // pred_region
      %s26 = ssub.s32 256, 256
      %27 = vsyncadd [#allocation6], %s26
      %s28 = sshll.u32 [#allocation5], 4
      %s29 = int_to_ptr.vmem [resolvable:$true] %s28
      %34 = dma.hbm_to_vmem [thread:$0]  %s1, 256, %s29, [#allocation6], 128, 128, 8
    $region9: #{tpu_custom_call.1} parent=1 // pred_fallthru
      _
    // Predicated region
    $region10: #{tpu_custom_call.1} parent=1 // pred_check
      _
    $region11: #{tpu_custom_call.1} parent=1 // pred_check_branch
      %36 = sbr.rel (0) target = $region13
    $region12: #{tpu_custom_call.1} parent=1 // pred_region
      _
    $region13: #{tpu_custom_call.1} parent=1 // pred_fallthru
      _
    // Predicated region
    $region14: #{tpu_custom_call.1} parent=1 // pred_check
      _
    $region15: #{tpu_custom_call.1} parent=1 // pred_check_branch
      %38 = sbr.rel (0) target = $region17
    $region16: #{tpu_custom_call.1} parent=1 // pred_region
      %s40 = ssub.s32 512, 512
      %41 = vsyncadd [#allocation6], %s40
      %s42 = sshll.u32 [#allocation7], 4
      %s43 = int_to_ptr.vmem [resolvable:$true] %s42
      %48 = dma.hbm_to_vmem [thread:$0]  %s3, 512, %s43, [#allocation6], 128, 128, 8
    $region17: #{tpu_custom_call.1} parent=1 // pred_fallthru
      _
    // Predicated region
    $region18: #{tpu_custom_call.1} parent=1 // pred_check
      _
    $region19: #{tpu_custom_call.1} parent=1 // pred_check_branch
      %50 = sbr.rel (0) target = $region21
    $region20: #{tpu_custom_call.1} parent=1 // pred_region
      _
    $region21: #{tpu_custom_call.1} parent=1 // pred_fallthru
      _
    // Predicated region
    $region22: #{tpu_custom_call.1} parent=1 // pred_check
      _
    $region23: #{tpu_custom_call.1} parent=1 // pred_check_branch
      %52 = sbr.rel (0) target = $region25
    $region24: #{tpu_custom_call.1} parent=1 // pred_region
      %53 = dma.done [#allocation3], 128
    $region25: #{tpu_custom_call.1} parent=1 // pred_fallthru
      _
    // Predicated region
    $region26: #{tpu_custom_call.1} parent=1 // pred_check
      _
    $region27: #{tpu_custom_call.1} parent=1 // pred_check_branch
      %55 = sbr.rel (0) target = $region29
    $region28: #{tpu_custom_call.1} parent=1 // pred_region
      %56 = dma.done [#allocation6], 256
    $region29: #{tpu_custom_call.1} parent=1 // pred_fallthru
      _
    // Predicated region
    $region30: #{tpu_custom_call.1} parent=1 // pred_check
      _
    $region31: #{tpu_custom_call.1} parent=1 // pred_check_branch
      %58 = sbr.rel (0) target = $region33
    $region32: #{tpu_custom_call.1} parent=1 // pred_region
      %59 = dma.done [#allocation6], 512
    $region33: #{tpu_custom_call.1} parent=1 // pred_fallthru
      _
    %v60 = vld [vmem:[#allocation2] sm:$0xff]
    %v61 = vld [vmem:[#allocation5] sm:$0xff]
    %v62 = vld [vmem:[#allocation5 + $0x8] sm:$0xff]
    %v63 = vld [vmem:[%s2] sm:$0x1]
    %v65 = vlaneseq
    %v66 = vshrl.u32 %v65, 7
    %v67 = vsub.s32 0, %v66
    %v68 = vrot.slane %v63, %v67
    %vm70 = vcmask 130048
    %v72 = vsel %vm70, %v60, 0
    %74 = vmatprep.subr.mxu0 0.0
    %75 = vmatpush1.msra.mxu0 0.0
    %76 = vmatprep.subr.mxu0 0.0
    %77 = vmatpush1.msra.mxu0 0.0
    %78 = vmatprep.subr.mxu0 0.0
    %79 = vmatpush1.msra.mxu0 0.0
    %80 = vmatprep.subr.mxu0 0.0
    %81 = vmatpush1.msra.mxu0 0.0
    %82 = vmatprep.subr.mxu0 0.0
    %83 = vmatpush1.msra.mxu0 0.0
    %84 = vmatprep.subr.mxu0 0.0
    %85 = vmatpush1.msra.mxu0 0.0
    %86 = vmatprep.subr.mxu0 0.0
    %87 = vmatpush1.msra.mxu0 0.0
    %88 = vmatprep.subr.mxu0 0.0
    %89 = vmatpush1.msra.mxu0 0.0
    %90 = vmatprep.subr.mxu0 0.0
    %91 = vmatpush1.msra.mxu0 0.0
    %92 = vmatprep.subr.mxu0 0.0
    %93 = vmatpush1.msra.mxu0 0.0
    %94 = vmatprep.subr.mxu0 0.0
    %95 = vmatpush1.msra.mxu0 0.0
    %96 = vmatprep.subr.mxu0 0.0
    %97 = vmatpush1.msra.mxu0 0.0
    %98 = vmatprep.subr.mxu0 0.0
    %99 = vmatpush1.msra.mxu0 0.0
    %100 = vmatprep.subr.mxu0 0.0
    %101 = vmatpush1.msra.mxu0 0.0
    %102 = vmatprep.subr.mxu0 0.0
    %103 = vmatpush1.msra.mxu0 %v62
    %104 = vmatprep.subr.mxu0 0.0
    %105 = vmatpush1.msra.mxu0 %v61
    %106 = vmatprep.subr.mxu0 0.0
    %107 = vmatpush2.msra.mxu0 0.0
    %108 = vmatprep.subr.mxu0 0.0
    %109 = vmatpush2.msra.mxu0 0.0
    %110 = vmatprep.subr.mxu0 0.0
    %111 = vmatpush2.msra.mxu0 0.0
    %112 = vmatprep.subr.mxu0 0.0
    %113 = vmatpush2.msra.mxu0 0.0
    %114 = vmatprep.subr.mxu0 0.0
    %115 = vmatpush2.msra.mxu0 0.0
    %116 = vmatprep.subr.mxu0 0.0
    %117 = vmatpush2.msra.mxu0 0.0
    %118 = vmatprep.subr.mxu0 0.0
    %119 = vmatpush2.msra.mxu0 0.0
    %120 = vmatprep.subr.mxu0 0.0
    %121 = vmatpush2.msra.mxu0 0.0
    %122 = vmatprep.subr.mxu0 0.0
    %123 = vmatpush2.msra.mxu0 0.0
    %124 = vmatprep.subr.mxu0 0.0
    %125 = vmatpush2.msra.mxu0 0.0
    %126 = vmatprep.subr.mxu0 0.0
    %127 = vmatpush2.msra.mxu0 0.0
    %128 = vmatprep.subr.mxu0 0.0
    %129 = vmatpush2.msra.mxu0 0.0
    %130 = vmatprep.subr.mxu0 0.0
    %131 = vmatpush2.msra.mxu0 0.0
    %132 = vmatprep.subr.mxu0 0.0
    %133 = vmatpush2.msra.mxu0 0.0
    %134 = vmatprep.subr.mxu0 0.0
    %135 = vmatpush2.msra.mxu0 0.0
    %136 = vmatprep.subr.mxu0 0.0
    %137 = vmatpush2.msra.mxu0 0.0
    %138 = vmatprep.mubr.f32.mxu0 0.0
    %139 = vmatmul.mubr.f32.gmra.mxu0 %v72
    %v140 = vpop.f32.mrf.mxu0
    %v141 = vadd.f32 %v68, %v140
    %v142 = vpop.f32.mrf.mxu0
    %143 = vdwg.mxu0
    %v144 = vmax.f32 %v141, 0.0
    %v145 = vld [vmem:[#allocation7] sm:$0xff]
    %v146 = vld [vmem:[#allocation7 + $0x8] sm:$0xff]
    %v147 = vld [vmem:[#allocation7 + $0x10] sm:$0xff]
    %v148 = vld [vmem:[#allocation7 + $0x18] sm:$0xff]
    %v149 = vld [vmem:[%s4] sm:$0x1]
    %v151 = vlaneseq
    %v152 = vshrl.u32 %v151, 7
    %v153 = vsub.s32 0, %v152
    %v154 = vrot.slane %v149, %v153
    %vm156 = vcmask 261120
    %v158 = vsel %vm156, %v144, 0
    %160 = vmatprep.subr.mxu0 0.0
    %161 = vmatpush1.msra.mxu0 0.0
    %162 = vmatprep.subr.mxu0 0.0
    %163 = vmatpush1.msra.mxu0 0.0
    %164 = vmatprep.subr.mxu0 0.0
    %165 = vmatpush1.msra.mxu0 0.0
    %166 = vmatprep.subr.mxu0 0.0
    %167 = vmatpush1.msra.mxu0 0.0
    %168 = vmatprep.subr.mxu0 0.0
    %169 = vmatpush1.msra.mxu0 0.0
    %170 = vmatprep.subr.mxu0 0.0
    %171 = vmatpush1.msra.mxu0 0.0
    %172 = vmatprep.subr.mxu0 0.0
    %173 = vmatpush1.msra.mxu0 0.0
    %174 = vmatprep.subr.mxu0 0.0
    %175 = vmatpush1.msra.mxu0 0.0
    %176 = vmatprep.subr.mxu0 0.0
    %177 = vmatpush1.msra.mxu0 0.0
    %178 = vmatprep.subr.mxu0 0.0
    %179 = vmatpush1.msra.mxu0 0.0
    %180 = vmatprep.subr.mxu0 0.0
    %181 = vmatpush1.msra.mxu0 0.0
    %182 = vmatprep.subr.mxu0 0.0
    %183 = vmatpush1.msra.mxu0 0.0
    %184 = vmatprep.subr.mxu0 0.0
    %185 = vmatpush1.msra.mxu0 %v148
    %186 = vmatprep.subr.mxu0 0.0
    %187 = vmatpush1.msra.mxu0 %v147
    %188 = vmatprep.subr.mxu0 0.0
    %189 = vmatpush1.msra.mxu0 %v146
    %190 = vmatprep.subr.mxu0 0.0
    %191 = vmatpush1.msra.mxu0 %v145
    %192 = vmatprep.subr.mxu0 0.0
    %193 = vmatpush2.msra.mxu0 0.0
    %194 = vmatprep.subr.mxu0 0.0
    %195 = vmatpush2.msra.mxu0 0.0
    %196 = vmatprep.subr.mxu0 0.0
    %197 = vmatpush2.msra.mxu0 0.0
    %198 = vmatprep.subr.mxu0 0.0
    %199 = vmatpush2.msra.mxu0 0.0
    %200 = vmatprep.subr.mxu0 0.0
    %201 = vmatpush2.msra.mxu0 0.0
    %202 = vmatprep.subr.mxu0 0.0
    %203 = vmatpush2.msra.mxu0 0.0
    %204 = vmatprep.subr.mxu0 0.0
    %205 = vmatpush2.msra.mxu0 0.0
    %206 = vmatprep.subr.mxu0 0.0
    %207 = vmatpush2.msra.mxu0 0.0
    %208 = vmatprep.subr.mxu0 0.0
    %209 = vmatpush2.msra.mxu0 0.0
    %210 = vmatprep.subr.mxu0 0.0
    %211 = vmatpush2.msra.mxu0 0.0
    %212 = vmatprep.subr.mxu0 0.0
    %213 = vmatpush2.msra.mxu0 0.0
    %214 = vmatprep.subr.mxu0 0.0
    %215 = vmatpush2.msra.mxu0 0.0
    %216 = vmatprep.subr.mxu0 0.0
    %217 = vmatpush2.msra.mxu0 0.0
    %218 = vmatprep.subr.mxu0 0.0
    %219 = vmatpush2.msra.mxu0 0.0
    %220 = vmatprep.subr.mxu0 0.0
    %221 = vmatpush2.msra.mxu0 0.0
    %222 = vmatprep.subr.mxu0 0.0
    %223 = vmatpush2.msra.mxu0 0.0
    %224 = vmatprep.mubr.f32.mxu0 0.0
    %225 = vmatmul.mubr.f32.gmra.mxu0 %v158
    %v226 = vpop.f32.mrf.mxu0
    %v227 = vadd.f32 %v154, %v226
    %v228 = vpop.f32.mrf.mxu0
    %229 = vdwg.mxu0
    %v230 = vsub.f32 0.0, %v227
    %v231 = vmul.f32 %v230, 1.442695
    %v232 = vpow.pop %v231
    %v233 = vadd.f32 %v232, 1.0
    %v234 = vrcp.pop %v233
    %235 = vst [vmem:[#allocation8] sm:$0xff] %v234
    // Predicated region
    $region34: #{tpu_custom_call.1} parent=1 // pred_check
      _
    $region35: #{tpu_custom_call.1} parent=1 // pred_check_branch
      %237 = sbr.rel (0) target = $region37
    $region36: #{tpu_custom_call.1} parent=1 // pred_region
      %s239 = ssub.s32 128, 128
      %240 = vsyncadd [#allocation4], %s239
      %s242 = sshll.u32 [#allocation8], 4
      %s243 = int_to_ptr.vmem [resolvable:$true] %s242
      %245 = dma.vmem_to_hbm [thread:$0]  %s243, 128, %s5, [#allocation4]
    $region37: #{tpu_custom_call.1} parent=1 // pred_fallthru
      _
    // Predicated region
    $region38: #{tpu_custom_call.1} parent=1 // pred_check
      _
    $region39: #{tpu_custom_call.1} parent=1 // pred_check_branch
      %247 = sbr.rel (0) target = $region41
    $region40: #{tpu_custom_call.1} parent=1 // pred_region
      %248 = dma.done [#allocation4], 128
    $region41: #{tpu_custom_call.1} parent=1 // pred_fallthru
      _
    %249 = vsyncpa [#allocation3], 1
    %250 = vsyncpa [#allocation6], 1
    %251 = vsyncpa [#allocation4], 1

</llo_original>
